<compile_context>
chip_gen: v7x
topology: tpu7x:2x2x1
jax: 0.10.0
libtpu: 0.0.40
codegen_flags: <defaults>
</compile_context>

<pallas_src>
import functools

import jax
import jax.numpy as jnp
from jax.experimental import pallas as pl
from jax.experimental.pallas import tpu as pltpu

_MIB = 1024 * 1024


def _round_up(x, m):
    return ((x + m - 1) // m) * m


def _pick_tile(dim, target, align):
    """Largest multiple of `align` that divides `dim` and is <= target."""
    if dim % align != 0:
        return dim          # full-dim fallback (only hit if padding was skipped)
    t = max(align, min(target, dim))
    t = (t // align) * align
    while t >= align:
        if dim % t == 0:
            return t
        t -= align
    return dim


def _chip_policy():
    """Return (vmem_limit_bytes, vmem_budget_bytes, target_block_bytes, num_tc)."""
    vmem_cap = 128 * _MIB
    try:
        info = pltpu.get_tpu_info()
        cap = getattr(info, "vmem_capacity_bytes", None)
        if cap:
            vmem_cap = int(cap)
    except Exception:
        pass
    kind = ""
    try:
        kind = jax.devices()[0].device_kind.lower()
    except Exception:
        pass
    num_tc = 2 if ("v7" in kind or "7x" in kind) else 1
    if num_tc == 2:
        vmem_cap = min(vmem_cap, 64 * _MIB)   # v7x: 64 MiB physical per TC
    vmem_limit = max(32 * _MIB, min(vmem_cap - 16 * _MIB, 100 * _MIB))
    if vmem_cap <= 64 * _MIB:
        # v7x: 48 MiB limit, 46 MiB working-set budget, ~8 MiB W blocks.
        vmem_budget = vmem_limit - 2 * _MIB
        target_block_bytes = 8 * _MIB
    else:
        # v5e/v6e: 100 MiB limit, 92 MiB budget, ~16 MiB W blocks.
        vmem_budget = vmem_limit - 8 * _MIB
        target_block_bytes = 16 * _MIB
    return int(vmem_limit), int(vmem_budget), target_block_bytes, num_tc


def _lora_kernel(w_ref, b_ref, a_ref, o_ref, *, scale, tile_m, b_resident):
    if b_resident:
        # b_ref holds the full (padded_in, rank) matrix, VMEM-resident across
        # the whole grid; slice the rows for this block (sublane-dim slice,
        # start is a multiple of tile_m which is a multiple of the sublane
        # packing).
        i = pl.program_id(1)                       # inner grid axis: features_in
        m0 = pl.multiple_of(i * tile_m, tile_m)
        b = b_ref[pl.ds(m0, tile_m), :]
    else:
        b = b_ref[...]
    # Fold `scale` into the small (tile_m, rank) operand: O(tm*rank) multiplies
    # instead of O(tm*tn) on the delta tile.
    b = b.astype(jnp.float32) * scale
    delta = jnp.dot(b, a_ref[...].astype(jnp.float32),
                    preferred_element_type=jnp.float32)
    # Add in f32, single down-cast at the end (no bf16 double rounding).
    o_ref[...] = (w_ref[...].astype(jnp.float32) + delta).astype(o_ref.dtype)


def lora_parametrization(original_weights, lora_B, lora_A, *, alpha, rank,
                         enabled=True, tile_m=None, tile_n=None):
    """Apply the LoRA delta to `original_weights` with a Pallas TPU kernel."""
    if not enabled:
        return original_weights

    scale = alpha / rank
    features_in, features_out = lora_B.shape[0], lora_A.shape[1]
    assert lora_B.shape == (features_in, rank)
    assert lora_A.shape == (rank, features_out)

    # Work in the natural 2-D (features_in, features_out) layout; the final
    # .view(original_weights.shape) is a pure reshape done in plain JAX.
    w2d = original_weights.reshape(features_in, features_out)
    itemsize = jnp.dtype(w2d.dtype).itemsize
    align_m = {4: 8, 2: 16, 1: 32}.get(itemsize, 8)

    # --- pad misaligned dims (zero-pad, slice back after the kernel) -------
    # Keeps every store a full, unmasked 128-lane vst and keeps block shapes
    # controllable by the VMEM-budget loop for arbitrarily shaped weights.
    padded_in = _round_up(features_in, align_m)
    padded_out = _round_up(features_out, 128)
    needs_pad = (padded_in != features_in) or (padded_out != features_out)
    if needs_pad:
        w2d = jnp.pad(w2d, ((0, padded_in - features_in),
                            (0, padded_out - features_out)))
        lora_B = jnp.pad(lora_B, ((0, padded_in - features_in), (0, 0)))
        lora_A = jnp.pad(lora_A, ((0, 0), (0, padded_out - features_out)))

    vmem_limit, vmem_budget, target_block_bytes, num_tc = _chip_policy()

    # --- tile selection: big, lane-dense, byte-sized blocks ----------------
    if tile_n is None:
        tile_n = _pick_tile(padded_out, 2048, 128)
    if tile_m is None:
        tm_target = max(align_m, target_block_bytes // (tile_n * itemsize))
        tile_m = _pick_tile(padded_in, tm_target, align_m)

    # Keep lora_B fully VMEM-resident (never re-DMA'd) when its lane-padded
    # footprint is small; otherwise stream it per block (tiny DMA anyway).
    b_resident = 2 * padded_in * 128 * itemsize <= 2 * _MIB

    def footprint(tm, tn):
        # W in + out blocks, double-buffered.
        w_bufs = 2 * 2 * tm * tn * itemsize
        # In-kernel f32 intermediates (delta tile, upcast-W for sub-32-bit).
        f32_tmp = (2 if itemsize < 4 else 1) * tm * tn * 4
        # lora_A block(s): sublane-padded to >= 8 rows, double-buffered.
        a_bufs = 2 * max(rank, 8) * tn * itemsize
        # lora_B: lane-padded to 128 lanes.
        if b_resident:
            b_bufs = 2 * padded_in * 128 * itemsize
        else:
            b_bufs = 2 * tm * 128 * itemsize
        return w_bufs + f32_tmp + a_bufs + b_bufs

    while footprint(tile_m, tile_n) > vmem_budget:
        if tile_n > 128:
            new_tn = _pick_tile(padded_out, max(tile_n // 2, 128), 128)
            if new_tn < tile_n:
                tile_n = new_tn
                continue
        if tile_m > align_m:
            new_tm = _pick_tile(padded_in, max(tile_m // 2, align_m), align_m)
            if new_tm < tile_m:
                tile_m = new_tm
                continue
        break

    # Megacore gating: only multi-TC chips (v7x) benefit from extra grid
    # steps; on v5e/v6e the grid is a serial loop and shrinking tiles just
    # adds ~0.35 us/step. Never shrink blocks below ~512 KiB.
    if num_tc >= 2:
        min_block_bytes = 512 * 1024
        while (padded_in // tile_m) * (padded_out // tile_n) < 2 * num_tc:
            if (tile_m // 2) * tile_n * itemsize >= min_block_bytes:
                new_tm = _pick_tile(padded_in, tile_m // 2, align_m)
                if new_tm < tile_m:
                    tile_m = new_tm
                    continue
            if tile_m * (tile_n // 2) * itemsize >= min_block_bytes:
                new_tn = _pick_tile(padded_out, tile_n // 2, 128)
                if new_tn < tile_n:
                    tile_n = new_tn
                    continue
            break

    grid_m = padded_in // tile_m
    grid_n = padded_out // tile_n
    # Outer axis: features_out tiles (A re-DMA'd only on outer change),
    # inner axis: features_in tiles.
    grid = (grid_n, grid_m)

    w_spec = pl.BlockSpec((tile_m, tile_n), lambda j, i: (i, j))
    if b_resident:
        b_spec = pl.BlockSpec((padded_in, rank), lambda j, i: (0, 0))
    else:
        b_spec = pl.BlockSpec((tile_m, rank), lambda j, i: (i, 0))
    a_spec = pl.BlockSpec((rank, tile_n), lambda j, i: (0, j))
    o_spec = pl.BlockSpec((tile_m, tile_n), lambda j, i: (i, j))

    w_bytes = padded_in * padded_out * itemsize
    cost = pl.CostEstimate(
        flops=2 * padded_in * padded_out * rank,
        transcendentals=0,
        bytes_accessed=(2 * w_bytes
                        + lora_B.size * jnp.dtype(lora_B.dtype).itemsize
                        + lora_A.size * jnp.dtype(lora_A.dtype).itemsize),
    )

    out2d = pl.pallas_call(
        functools.partial(_lora_kernel, scale=scale, tile_m=tile_m,
                          b_resident=b_resident),
        out_shape=jax.ShapeDtypeStruct((padded_in, padded_out), w2d.dtype),
        grid_spec=pltpu.PrefetchScalarGridSpec(
            num_scalar_prefetch=0,
            grid=grid,
            in_specs=[w_spec, b_spec, a_spec],
            out_specs=o_spec,
        ),
        compiler_params=pltpu.CompilerParams(
            dimension_semantics=("parallel", "parallel"),
            vmem_limit_bytes=vmem_limit,
        ),
        cost_estimate=cost,
        # W and W_new share shape/dtype: allow in-place update of the weight
        # buffer when the caller donates it.
        input_output_aliases={0: 0},
    )(w2d, lora_B, lora_A)

    if needs_pad:
        out2d = out2d[:features_in, :features_out]
    return out2d.reshape(original_weights.shape)


if __name__ == "__main__":
    features_in, features_out = 32, 128
    rank, alpha = 4, 8.0
    scale = alpha / rank

    key = jax.random.PRNGKey(0)
    k_w, k_a, k_b, k_w2, k_a2, k_b2 = jax.random.split(key, 6)

    # Parameter init mirrors the module __init__ (lora_B zeros, lora_A ~ N(0,1));
    # perturb lora_B so the matmul path is actually exercised.
    lora_A = jax.random.normal(k_a, (rank, features_out), dtype=jnp.float32)
    lora_B = 0.01 * jax.random.normal(k_b, (features_in, rank), dtype=jnp.float32)
    W = jax.random.normal(k_w, (features_in, features_out), dtype=jnp.float32)

    out = lora_parametrization(W, lora_B, lora_A, alpha=alpha, rank=rank)
    out = jax.block_until_ready(out)
    ref = W + (lora_B @ lora_A) * scale
    assert out.shape == W.shape
    assert jnp.allclose(out, ref, atol=1e-5, rtol=1e-5)

    # Disabled path returns the weights untouched.
    out_dis = lora_parametrization(W, lora_B, lora_A, alpha=alpha, rank=rank,
                                   enabled=False)
    assert jnp.array_equal(jax.block_until_ready(out_dis), W)

    # Non-128-aligned features_out (exercise the pad + slice path).
    fi2, fo2 = 48, 96
    W2 = jax.random.normal(k_w2, (fi2, fo2), dtype=jnp.float32)
    A2 = jax.random.normal(k_a2, (rank, fo2), dtype=jnp.float32)
    B2 = 0.01 * jax.random.normal(k_b2, (fi2, rank), dtype=jnp.float32)
    out2 = jax.block_until_ready(
        lora_parametrization(W2, B2, A2, alpha=alpha, rank=rank))
    ref2 = W2 + (B2 @ A2) * scale
    assert out2.shape == W2.shape
    assert jnp.allclose(out2, ref2, atol=1e-5, rtol=1e-5)

    # bf16 weights: f32 accumulate + single downcast inside the kernel.
    Wb = W.astype(jnp.bfloat16)
    Ab = lora_A.astype(jnp.bfloat16)
    Bb = lora_B.astype(jnp.bfloat16)
    outb = jax.block_until_ready(
        lora_parametrization(Wb, Bb, Ab, alpha=alpha, rank=rank))
    refb = (Wb.astype(jnp.float32)
            + (Bb.astype(jnp.float32) @ Ab.astype(jnp.float32)) * scale)
    assert jnp.allclose(outb.astype(jnp.float32), refb, atol=2e-2, rtol=2e-2)

    # NOTE: the given PyTorch module has no dropout, so nothing is omitted.
    print("KERNEL_OK")
</pallas_src>

<mosaic_0001>
module attributes {stable_mosaic.version = 11 : i64} {
  func.func @_lora_kernel(%arg0: i32, %arg1: i32, %arg2: memref<32x128xf32, #tpu.memory_space<vmem>>, %arg3: memref<32x4xf32, #tpu.memory_space<vmem>>, %arg4: memref<4x128xf32, #tpu.memory_space<vmem>>, %arg5: memref<32x128xf32, #tpu.memory_space<vmem>>) attributes {dimension_semantics = [#tpu.dimension_semantics<parallel>, #tpu.dimension_semantics<parallel>], iteration_bounds = array<i64: 1, 1>, scalar_prefetch = 0 : i64, scratch_operands = 0 : i64, tpu.core_type = #tpu.core_type<tc>, window_params = [{transform_indices = @transform_0, window_bounds = array<i64: 32, 128>}, {pipeline_mode = #tpu.pipeline_mode<synchronous>, transform_indices = @transform_1, window_bounds = array<i64: 32, 4>}, {transform_indices = @transform_2, window_bounds = array<i64: 4, 128>}, {transform_indices = @transform_3, window_bounds = array<i64: 32, 128>}]} {
    %c32_i32 = arith.constant 32 : i32
    %0 = arith.muli %arg1, %c32_i32 : i32
    %1 = tpu.assume_multiple %0, 32 : i32
    %2 = arith.index_cast %1 : i32 to index
    %c0 = arith.constant 0 : index
    %3 = vector.load %arg3[%2, %c0] : memref<32x4xf32, #tpu.memory_space<vmem>>, vector<32x4xf32>
    %cst = arith.constant 2.000000e+00 : f32
    %4 = vector.broadcast %cst : f32 to vector<32x4xf32>
    %5 = arith.mulf %3, %4 : vector<32x4xf32>
    %c0_0 = arith.constant 0 : index
    %c0_1 = arith.constant 0 : index
    %6 = vector.load %arg4[%c0_0, %c0_1] : memref<4x128xf32, #tpu.memory_space<vmem>>, vector<4x128xf32>
    %cst_2 = arith.constant dense<0.000000e+00> : vector<32x128xf32>
    %7 = tpu.matmul %5, %6, %cst_2 {dimension_numbers = #tpu.dot_dimension_numbers<[1], [0], [0], [1], [0, 0, 1, 1], [], []>} : vector<32x4xf32>, vector<4x128xf32>, vector<32x128xf32> -> vector<32x128xf32>
    %c0_3 = arith.constant 0 : index
    %c0_4 = arith.constant 0 : index
    %8 = vector.load %arg2[%c0_3, %c0_4] : memref<32x128xf32, #tpu.memory_space<vmem>>, vector<32x128xf32>
    %9 = arith.addf %8, %7 : vector<32x128xf32>
    %c0_5 = arith.constant 0 : index
    %c0_6 = arith.constant 0 : index
    %10 = vector.load %arg5[%c0_5, %c0_6] : memref<32x128xf32, #tpu.memory_space<vmem>>, vector<32x128xf32>
    tpu.vector_store %arg5[%c0_5, %c0_6], %9 {strides = array<i32>} : memref<32x128xf32, #tpu.memory_space<vmem>>, vector<32x128xf32>,
    return
  }
  func.func @transform_0(%arg0: i32, %arg1: i32) -> (i32, i32) {
    %c0_i32 = arith.constant 0 : i32
    return %arg1, %arg0 : i32, i32
  }
  func.func @transform_1(%arg0: i32, %arg1: i32) -> (i32, i32) {
    %c0_i32 = arith.constant 0 : i32
    %c0_i32_0 = arith.constant 0 : i32
    %c0_i32_1 = arith.constant 0 : i32
    return %c0_i32, %c0_i32_0 : i32, i32
  }
  func.func @transform_2(%arg0: i32, %arg1: i32) -> (i32, i32) {
    %c0_i32 = arith.constant 0 : i32
    %c0_i32_0 = arith.constant 0 : i32
    return %c0_i32, %arg0 : i32, i32
  }
  func.func @transform_3(%arg0: i32, %arg1: i32) -> (i32, i32) {
    %c0_i32 = arith.constant 0 : i32
    return %arg1, %arg0 : i32, i32
  }
}

</mosaic_0001>

<llo_original>
// kernel: tpu_custom_call.1
$region0: #{tpu_custom_call.1}
  #allocation0 [shape = 'u32[]', space=smem, size = 0x4, offset = 0x4, fixed_abs, tag = 'smem constant byte address 0x4 - core index']
  #allocation1 [shape = 'u32[144,128]{1,0:T(1,128)}', space=vmem, size = 0x12000, scoped, tag = 'internal scratch']
  %s0 = inlined_call_operand.hbm [shape: f32[32,128], index: 0, kind: input, shape index: {}, may-alias: {0,3}]
  %s1 = inlined_call_operand.hbm [shape: f32[32,4], index: 1, kind: input, shape index: {}]
  %s2 = inlined_call_operand.hbm [shape: f32[4,128], index: 2, kind: input, shape index: {}]
  %s3 = inlined_call_operand.hbm [shape: f32[32,128], index: 3, kind: output, shape index: {}, may-alias: {0,3}]
  %s4 = sld [smem:[#allocation0]]
  $region34: #{tpu_custom_call.1} parent=0
    _
  %s6 = ssub.s32 1, %s4
  %s7 = scalar_select 0, %s6, %s4
  $region1: #{tpu_custom_call.1} parent=0
    #allocation2 [shape = 'u8[16384]{0}', space=vmem, size = 0x4000, scoped, tag = 'input window, operand 0, single buffered']
    #allocation3 [shape = 's32[1]{0}', space=sflag, size = 0x4, scoped, tag = 'scoped memory for tpu_custom_call.1']
    #allocation4 [shape = 's32[1]{0}', space=sflag, size = 0x4, scoped, tag = 'scoped memory for tpu_custom_call.1']
    #allocation5 [shape = 'u8[16384]{0}', space=vmem, size = 0x4000, scoped, tag = 'input window, operand 1, single buffered']
    #allocation6 [shape = 's32[1]{0}', space=sflag, size = 0x4, scoped, tag = 'scoped memory for tpu_custom_call.1']
    #allocation7 [shape = 'u8[2048]{0}', space=vmem, size = 0x800, scoped, tag = 'input window, operand 2, single buffered']
    #allocation8 [shape = 'u8[16384]{0}', space=vmem, size = 0x4000, scoped, tag = 'output window, operand 0, single buffered']
    %8 = vsyncpa [#allocation3], 0
    %9 = vsyncpa [#allocation6], 0
    %10 = vsyncpa [#allocation4], 0
    // Predicated region
    $region2: #{tpu_custom_call.1} parent=1 // pred_check
      _
    $region3: #{tpu_custom_call.1} parent=1 // pred_check_branch
      %12 = sbr.rel (0) target = $region5
    $region4: #{tpu_custom_call.1} parent=1 // pred_region
      %s14 = ssub.s32 512, 512
      %15 = vsyncadd [#allocation3], %s14
      %s16 = sshll.u32 [#allocation2], 4
      %s17 = int_to_ptr.vmem [resolvable:$true] %s16
      %22 = dma.hbm_to_vmem [thread:$0]  %s0, 512, %s17, [#allocation3], 128, 128, 8
    $region5: #{tpu_custom_call.1} parent=1 // pred_fallthru
      _
    // Predicated region
    $region6: #{tpu_custom_call.1} parent=1 // pred_check
      _
    $region7: #{tpu_custom_call.1} parent=1 // pred_check_branch
      %24 = sbr.rel (0) target = $region9
    $region8: #{tpu_custom_call.1} parent=1 // pred_region
      %s26 = ssub.s32 512, 512
      %27 = vsyncadd [#allocation6], %s26
      %s28 = sshll.u32 [#allocation5], 4
      %s29 = int_to_ptr.vmem [resolvable:$true] %s28
      %34 = dma.hbm_to_vmem [thread:$0]  %s1, 512, %s29, [#allocation6], 128, 128, 8
    $region9: #{tpu_custom_call.1} parent=1 // pred_fallthru
      _
    // Predicated region
    $region10: #{tpu_custom_call.1} parent=1 // pred_check
      _
    $region11: #{tpu_custom_call.1} parent=1 // pred_check_branch
      %36 = sbr.rel (0) target = $region13
    $region12: #{tpu_custom_call.1} parent=1 // pred_region
      %s38 = ssub.s32 64, 64
      %39 = vsyncadd [#allocation6], %s38
      %s41 = sshll.u32 [#allocation7], 4
      %s42 = int_to_ptr.vmem [resolvable:$true] %s41
      %44 = dma.hbm_to_vmem [thread:$0]  %s2, 64, %s42, [#allocation6]
    $region13: #{tpu_custom_call.1} parent=1 // pred_fallthru
      _
    // Predicated region
    $region14: #{tpu_custom_call.1} parent=1 // pred_check
      _
    $region15: #{tpu_custom_call.1} parent=1 // pred_check_branch
      %46 = sbr.rel (0) target = $region17
    $region16: #{tpu_custom_call.1} parent=1 // pred_region
      %47 = dma.done [#allocation3], 512
    $region17: #{tpu_custom_call.1} parent=1 // pred_fallthru
      _
    // Predicated region
    $region18: #{tpu_custom_call.1} parent=1 // pred_check
      _
    $region19: #{tpu_custom_call.1} parent=1 // pred_check_branch
      %49 = sbr.rel (0) target = $region21
    $region20: #{tpu_custom_call.1} parent=1 // pred_region
      %50 = dma.done [#allocation6], 512
    $region21: #{tpu_custom_call.1} parent=1 // pred_fallthru
      _
    // Predicated region
    $region22: #{tpu_custom_call.1} parent=1 // pred_check
      _
    $region23: #{tpu_custom_call.1} parent=1 // pred_check_branch
      %52 = sbr.rel (0) target = $region25
    $region24: #{tpu_custom_call.1} parent=1 // pred_region
      %53 = dma.done [#allocation6], 64
    $region25: #{tpu_custom_call.1} parent=1 // pred_fallthru
      _
    %s54 = smul.u32 0, 32
    %s55 = scalar_lea.vmem [#allocation5], %s54
    %v56 = vld [vmem:[%s55] sm:$0xff]
    %v57 = vld [vmem:[%s55 + $0x8] sm:$0xff]
    %v58 = vld [vmem:[%s55 + $0x10] sm:$0xff]
    %v59 = vld [vmem:[%s55 + $0x18] sm:$0xff]
    %v60 = vmul.f32 %v56, 2.0
    %v61 = vmul.f32 %v57, 2.0
    %v62 = vmul.f32 %v58, 2.0
    %v63 = vmul.f32 %v59, 2.0
    %v64 = vld [vmem:[#allocation7] sm:$0xf]
    %vm65 = vcmask 31744
    %v67 = vsel %vm65, %v60, 0
    %v70 = vsel %vm65, %v61, 0
    %v73 = vsel %vm65, %v62, 0
    %v76 = vsel %vm65, %v63, 0
    %vm78 = vcmask 1043456
    %v80 = vsel %vm78, %v64, 0
    %82 = vmatprep.subr.mxu0 0.0
    %83 = vmatpush1.msra.mxu0 %v80
    %84 = vmatprep.subr.mxu0 0.0
    %85 = vmatpush1.msra.mxu0 0.0
    %86 = vmatprep.subr.mxu0 0.0
    %87 = vmatpush1.msra.mxu0 0.0
    %88 = vmatprep.subr.mxu0 0.0
    %89 = vmatpush1.msra.mxu0 0.0
    %90 = vmatprep.subr.mxu0 0.0
    %91 = vmatpush1.msra.mxu0 0.0
    %92 = vmatprep.subr.mxu0 0.0
    %93 = vmatpush1.msra.mxu0 0.0
    %94 = vmatprep.subr.mxu0 0.0
    %95 = vmatpush1.msra.mxu0 0.0
    %96 = vmatprep.subr.mxu0 0.0
    %97 = vmatpush1.msra.mxu0 0.0
    %98 = vmatprep.subr.mxu0 0.0
    %99 = vmatpush1.msra.mxu0 0.0
    %100 = vmatprep.subr.mxu0 0.0
    %101 = vmatpush1.msra.mxu0 0.0
    %102 = vmatprep.subr.mxu0 0.0
    %103 = vmatpush1.msra.mxu0 0.0
    %104 = vmatprep.subr.mxu0 0.0
    %105 = vmatpush1.msra.mxu0 0.0
    %106 = vmatprep.subr.mxu0 0.0
    %107 = vmatpush1.msra.mxu0 0.0
    %108 = vmatprep.subr.mxu0 0.0
    %109 = vmatpush1.msra.mxu0 0.0
    %110 = vmatprep.subr.mxu0 0.0
    %111 = vmatpush1.msra.mxu0 0.0
    %112 = vmatprep.subr.mxu0 0.0
    %113 = vmatpush1.msra.mxu0 0.0
    %114 = vmatprep.subr.mxu0 0.0
    %115 = vmatpush1.msra.mxu0 0.0
    %116 = vmatprep.subr.mxu0 0.0
    %117 = vmatpush1.msra.mxu0 0.0
    %118 = vmatprep.subr.mxu0 0.0
    %119 = vmatpush1.msra.mxu0 0.0
    %120 = vmatprep.subr.mxu0 0.0
    %121 = vmatpush1.msra.mxu0 0.0
    %122 = vmatprep.subr.mxu0 0.0
    %123 = vmatpush1.msra.mxu0 0.0
    %124 = vmatprep.subr.mxu0 0.0
    %125 = vmatpush1.msra.mxu0 0.0
    %126 = vmatprep.subr.mxu0 0.0
    %127 = vmatpush1.msra.mxu0 0.0
    %128 = vmatprep.subr.mxu0 0.0
    %129 = vmatpush1.msra.mxu0 0.0
    %130 = vmatprep.subr.mxu0 0.0
    %131 = vmatpush1.msra.mxu0 0.0
    %132 = vmatprep.subr.mxu0 0.0
    %133 = vmatpush1.msra.mxu0 0.0
    %134 = vmatprep.subr.mxu0 0.0
    %135 = vmatpush1.msra.mxu0 0.0
    %136 = vmatprep.subr.mxu0 0.0
    %137 = vmatpush1.msra.mxu0 0.0
    %138 = vmatprep.subr.mxu0 0.0
    %139 = vmatpush1.msra.mxu0 0.0
    %140 = vmatprep.subr.mxu0 0.0
    %141 = vmatpush1.msra.mxu0 0.0
    %142 = vmatprep.subr.mxu0 0.0
    %143 = vmatpush1.msra.mxu0 0.0
    %144 = vmatprep.subr.mxu0 0.0
    %145 = vmatpush1.msra.mxu0 0.0
    %146 = vmatprep.mubr.f32.mxu0 0.0
    %147 = vmatmul.mubr.f32.gmra.mrb[0].mxu0 %v67
    %v148 = vpop.f32.mrb[0].mxu0
    %v149 = vadd.f32 0.0, %v148
    %v150 = vpop.f32.mrb[0].mxu0
    %151 = vmatprep.mubr.f32.mxu0 0.0
    %152 = vmatmul.mubr.f32.gmra.mrb[0].mxu0 %v70
    %v153 = vpop.f32.mrb[0].mxu0
    %v154 = vadd.f32 0.0, %v153
    %v155 = vpop.f32.mrb[0].mxu0
    %156 = vmatprep.mubr.f32.mxu0 0.0
    %157 = vmatmul.mubr.f32.gmra.mrb[0].mxu0 %v73
    %v158 = vpop.f32.mrb[0].mxu0
    %v159 = vadd.f32 0.0, %v158
    %v160 = vpop.f32.mrb[0].mxu0
    %161 = vmatprep.mubr.f32.mxu0 0.0
    %162 = vmatmul.mubr.f32.gmra.mrb[0].mxu0 %v76
    %v163 = vpop.f32.mrb[0].mxu0
    %v164 = vadd.f32 0.0, %v163
    %v165 = vpop.f32.mrb[0].mxu0
    %166 = vdwg.mxu0
    %v167 = vld [vmem:[#allocation2] sm:$0xff]
    %v168 = vld [vmem:[#allocation2 + $0x8] sm:$0xff]
    %v169 = vld [vmem:[#allocation2 + $0x10] sm:$0xff]
    %v170 = vld [vmem:[#allocation2 + $0x18] sm:$0xff]
    %v171 = vadd.f32 %v167, %v149
    %v172 = vadd.f32 %v168, %v154
    %v173 = vadd.f32 %v169, %v159
    %v174 = vadd.f32 %v170, %v164
    %175 = vst [vmem:[#allocation8] sm:$0xff] %v171
    %176 = vst [vmem:[#allocation8 + $0x8] sm:$0xff] %v172
    %177 = vst [vmem:[#allocation8 + $0x10] sm:$0xff] %v173
    %178 = vst [vmem:[#allocation8 + $0x18] sm:$0xff] %v174
    // Predicated region
    $region26: #{tpu_custom_call.1} parent=1 // pred_check
      _
    $region27: #{tpu_custom_call.1} parent=1 // pred_check_branch
      %180 = sbr.rel (0) target = $region29
    $region28: #{tpu_custom_call.1} parent=1 // pred_region
      %s182 = ssub.s32 512, 512
      %183 = vsyncadd [#allocation4], %s182
      %s184 = sshll.u32 [#allocation8], 4
      %s185 = int_to_ptr.vmem [resolvable:$true] %s184
      %190 = dma.vmem_to_hbm [thread:$0]  %s185, 512, %s3, [#allocation4], 128, 128, 8
    $region29: #{tpu_custom_call.1} parent=1 // pred_fallthru
      _
    // Predicated region
    $region30: #{tpu_custom_call.1} parent=1 // pred_check
      _
    $region31: #{tpu_custom_call.1} parent=1 // pred_check_branch
      %192 = sbr.rel (0) target = $region33
    $region32: #{tpu_custom_call.1} parent=1 // pred_region
      %193 = dma.done [#allocation4], 512
    $region33: #{tpu_custom_call.1} parent=1 // pred_fallthru
      _
    %194 = vsyncpa [#allocation3], 1
    %195 = vsyncpa [#allocation6], 1
    %196 = vsyncpa [#allocation4], 1

</llo_original>
